<compile_context>
chip_gen: v5e
topology: v5e:2x2
jax: 0.10.0
libtpu: 0.0.40
codegen_flags: <defaults>
</compile_context>

<pallas_src>
import jax
import jax.numpy as jnp
from jax.experimental import pallas as pl
from jax.experimental.pallas import tpu as pltpu


def rna_attention_kernel(
    x_ref,        # (TB, L, V)  f32   batch tile of inputs
    amask_ref,    # (TB, L)     f32   additive mask (0 keep / -1e30 masked)
    embed_w_ref,  # (V, H)      f32   resident weight
    pos_ref,      # (L, H)      f32   pos_embedding + embed bias (folded), resident
    attn_w_ref,   # (1, H)      f32   attention score weights (row), resident
    w1_ref,       # (H, Hh)     f32   resident weight
    b1_ref,       # (1, Hh)     f32   resident bias
    w2_ref,       # (1, Hh)     f32   output head weights (row), resident
    b2_ref,       # (1, 1)      f32   SMEM scalar
    out_ref,      # (1, TB)     f32   lane-dense output tile
):
    x = x_ref[...]
    TB, L, V = x.shape
    H = embed_w_ref.shape[1]

    # --- embedding linear (MXU) + fused positional/bias add (VPU) ----------
    h2d = jnp.dot(x.reshape(TB * L, V), embed_w_ref[...],
                  preferred_element_type=jnp.float32)          # (TB*L, H)
    h = h2d.reshape(TB, L, H) + pos_ref[...][None]             # (TB, L, H)

    # --- attention scores: Linear(H, 1) as VPU mul + lane reduce ------------
    # (a (rows, H) x (H, 1) MXU matmul would produce a single useful column)
    scores = jnp.sum(h * attn_w_ref[...], axis=-1)             # (TB, L)
    scores = scores + amask_ref[...]                           # additive mask

    # --- softmax over the sequence axis -------------------------------------
    m = jnp.max(scores, axis=1, keepdims=True)
    e = jnp.exp(scores - m)
    denom = jnp.sum(e, axis=1, keepdims=True)
    attn_w = e * pl.reciprocal(denom, approx=True)             # (TB, L)

    # --- weighted context reduction ------------------------------------------
    # TODO(synk): for much larger L, express this as a batched (1,L)x(L,H) dot.
    context = jnp.sum(attn_w[..., None] * h, axis=1)           # (TB, H)

    # --- output MLP head: Linear -> ReLU -> Linear(->1) -> Sigmoid -----------
    hid = jnp.dot(context, w1_ref[...], preferred_element_type=jnp.float32)
    hid = jnp.maximum(hid + b1_ref[...], 0.0)                  # (TB, Hh)
    logit = jnp.sum(hid * w2_ref[...], axis=-1) + b2_ref[0, 0]  # (TB,)
    out_ref[0, :] = jax.nn.sigmoid(logit)


def rna_attention_forward(x, mask, params, block_b=128):
    """Runs the fused forward. x: (B, L, V), mask: (B, L) -> (B,) float32."""
    B, L, V = x.shape
    H = params["embed_w"].shape[1]
    Hh = params["w1"].shape[1]

    # ---- constant folding in the wrapper ------------------------------------
    pos_eff = params["pos"][:L] + params["embed_b"]            # (L, H)
    attn_w_row = params["attn_w"].reshape(1, H)                # (1, H)
    w2_row = params["w2"].reshape(1, Hh)                       # (1, Hh)
    # attn_b is dropped: softmax is invariant to adding a scalar to all scores.

    # Additive float mask: 0 keep / -1e30 masked. Finite fill keeps
    # fully-masked (or padded) rows NaN-free while matching -inf semantics.
    amask = jnp.where(mask != 0, jnp.float32(-1e30), jnp.float32(0.0))

    # ---- batch tiling --------------------------------------------------------
    TB = int(min(block_b, B))
    num_tiles = (B + TB - 1) // TB
    B_pad = num_tiles * TB
    xf = x.astype(jnp.float32)
    if B_pad != B:
        xf = jnp.pad(xf, ((0, B_pad - B), (0, 0), (0, 0)))
        amask = jnp.pad(amask, ((0, B_pad - B), (0, 0)))

    out = pl.pallas_call(
        rna_attention_kernel,
        out_shape=jax.ShapeDtypeStruct((num_tiles, TB), jnp.float32),
        grid_spec=pltpu.PrefetchScalarGridSpec(
            num_scalar_prefetch=0,
            grid=(num_tiles,),
            in_specs=[
                pl.BlockSpec((TB, L, V), lambda b: (b, 0, 0)),   # x: tiled over batch
                pl.BlockSpec((TB, L), lambda b: (b, 0)),         # additive mask
                pl.BlockSpec((V, H), lambda b: (0, 0)),          # weights: resident
                pl.BlockSpec((L, H), lambda b: (0, 0)),
                pl.BlockSpec((1, H), lambda b: (0, 0)),
                pl.BlockSpec((H, Hh), lambda b: (0, 0)),
                pl.BlockSpec((1, Hh), lambda b: (0, 0)),
                pl.BlockSpec((1, Hh), lambda b: (0, 0)),
                pl.BlockSpec(memory_space=pltpu.MemorySpace.SMEM),  # b2 scalar
            ],
            out_specs=pl.BlockSpec((1, TB), lambda b: (b, 0)),   # lane-dense tile
        ),
        compiler_params=pltpu.CompilerParams(
            dimension_semantics=("parallel",),
        ),
    )(
        xf, amask,
        params["embed_w"], pos_eff, attn_w_row,
        params["w1"], params["b1"], w2_row, params["b2"],
    )
    return out.reshape(B_pad)[:B]   # matches torch .squeeze(-1)


def init_params(key, vocab_size=5, seq_len=8, hidden_dim=32):
    ks = jax.random.split(key, 10)
    H, V, L = hidden_dim, vocab_size, seq_len
    Hh = H // 2
    # weights stored pre-transposed: (in_features, out_features)
    return {
        "embed_w": jax.random.normal(ks[0], (V, H), jnp.float32) * 0.1,
        "embed_b": jax.random.normal(ks[1], (1, H), jnp.float32) * 0.1,
        "pos":     jax.random.normal(ks[2], (L, H), jnp.float32),
        "attn_w":  jax.random.normal(ks[3], (H, 1), jnp.float32) * 0.1,
        "attn_b":  jax.random.normal(ks[4], (1, 1), jnp.float32) * 0.1,
        "w1":      jax.random.normal(ks[5], (H, Hh), jnp.float32) * 0.1,
        "b1":      jax.random.normal(ks[6], (1, Hh), jnp.float32) * 0.1,
        "w2":      jax.random.normal(ks[7], (Hh, 1), jnp.float32) * 0.1,
        "b2":      jax.random.normal(ks[8], (1, 1), jnp.float32) * 0.1,
    }


def reference_forward(x, mask, p):
    # pure-JAX translation of the torch forward (incl. attn bias, -inf fill)
    h = x @ p["embed_w"] + p["embed_b"] + p["pos"][: x.shape[1]][None]
    scores = (h @ p["attn_w"])[..., 0] + p["attn_b"][0, 0]
    scores = jnp.where(mask != 0, -jnp.inf, scores)
    w = jax.nn.softmax(scores, axis=1)
    ctx = jnp.sum(w[..., None] * h, axis=1)
    hid = jax.nn.relu(ctx @ p["w1"] + p["b1"])
    return jax.nn.sigmoid(hid @ p["w2"] + p["b2"])[:, 0]


def _make_inputs(key, B, L, V):
    kx, km = jax.random.split(key, 2)
    tok = jax.random.randint(kx, (B, L), 0, V)
    x = jax.nn.one_hot(tok, V, dtype=jnp.float32)
    mask = (jax.random.uniform(km, (B, L)) > 0.7).astype(jnp.int32)
    mask = mask.at[:, 0].set(0)   # keep at least one unmasked position per row
    return x, mask


if __name__ == "__main__":
    L, V, H = 8, 5, 32
    key = jax.random.PRNGKey(0)
    k1, k2, kp = jax.random.split(key, 3)
    params = init_params(kp, vocab_size=V, seq_len=L, hidden_dim=H)

    # --- small single-tile check (B=2) ---------------------------------------
    x, mask = _make_inputs(k1, 2, L, V)
    out = jax.block_until_ready(rna_attention_forward(x, mask, params))
    ref = reference_forward(x, mask, params)
    assert out.shape == (2,)
    assert jnp.allclose(out, ref, atol=1e-3, rtol=1e-3), (out, ref)

    # --- multi-tile check: exercises the batch grid + padding path -----------
    x2, mask2 = _make_inputs(k2, 20, L, V)
    out2 = jax.block_until_ready(rna_attention_forward(x2, mask2, params, block_b=8))
    ref2 = reference_forward(x2, mask2, params)
    assert out2.shape == (20,)
    assert jnp.allclose(out2, ref2, atol=1e-3, rtol=1e-3), (out2, ref2)

    print("KERNEL_OK")
</pallas_src>

<mosaic_0001>
module attributes {stable_mosaic.version = 11 : i64} {
  func.func @rna_attention_kernel(%arg0: i32, %arg1: memref<2x8x5xf32, #tpu.memory_space<vmem>>, %arg2: memref<2x8xf32, #tpu.memory_space<vmem>>, %arg3: memref<5x32xf32, #tpu.memory_space<vmem>>, %arg4: memref<8x32xf32, #tpu.memory_space<vmem>>, %arg5: memref<1x32xf32, #tpu.memory_space<vmem>>, %arg6: memref<32x16xf32, #tpu.memory_space<vmem>>, %arg7: memref<1x16xf32, #tpu.memory_space<vmem>>, %arg8: memref<1x16xf32, #tpu.memory_space<vmem>>, %arg9: memref<1x1xf32, #tpu.memory_space<smem>>, %arg10: memref<1x2xf32, #tpu.memory_space<vmem>>) attributes {dimension_semantics = [#tpu.dimension_semantics<parallel>], iteration_bounds = array<i64: 1>, scalar_prefetch = 0 : i64, scratch_operands = 0 : i64, tpu.core_type = #tpu.core_type<tc>, window_params = [{transform_indices = @transform_0, window_bounds = array<i64: 2, 8, 5>}, {transform_indices = @transform_1, window_bounds = array<i64: 2, 8>}, {pipeline_mode = #tpu.pipeline_mode<synchronous>, transform_indices = @transform_2, window_bounds = array<i64: 5, 32>}, {pipeline_mode = #tpu.pipeline_mode<synchronous>, transform_indices = @transform_3, window_bounds = array<i64: 8, 32>}, {pipeline_mode = #tpu.pipeline_mode<synchronous>, transform_indices = @transform_4, window_bounds = array<i64: 1, 32>}, {pipeline_mode = #tpu.pipeline_mode<synchronous>, transform_indices = @transform_5, window_bounds = array<i64: 32, 16>}, {pipeline_mode = #tpu.pipeline_mode<synchronous>, transform_indices = @transform_6, window_bounds = array<i64: 1, 16>}, {pipeline_mode = #tpu.pipeline_mode<synchronous>, transform_indices = @transform_7, window_bounds = array<i64: 1, 16>}, {transform_indices = @transform_8, window_bounds = array<i64: 1, 1>}, {transform_indices = @transform_9, window_bounds = array<i64: 1, 2>}]} {
    %c0 = arith.constant 0 : index
    %c0_0 = arith.constant 0 : index
    %c0_1 = arith.constant 0 : index
    %0 = vector.load %arg1[%c0, %c0_0, %c0_1] : memref<2x8x5xf32, #tpu.memory_space<vmem>>, vector<2x8x5xf32>
    %1 = vector.shape_cast %0 : vector<2x8x5xf32> to vector<16x5xf32>
    %c0_2 = arith.constant 0 : index
    %c0_3 = arith.constant 0 : index
    %2 = vector.load %arg3[%c0_2, %c0_3] : memref<5x32xf32, #tpu.memory_space<vmem>>, vector<5x32xf32>
    %cst = arith.constant dense<0.000000e+00> : vector<16x32xf32>
    %3 = tpu.matmul %1, %2, %cst {dimension_numbers = #tpu.dot_dimension_numbers<[1], [0], [0], [1], [0, 0, 1, 1], [], []>} : vector<16x5xf32>, vector<5x32xf32>, vector<16x32xf32> -> vector<16x32xf32>
    %4 = vector.shape_cast %3 : vector<16x32xf32> to vector<2x8x32xf32>
    %c0_4 = arith.constant 0 : index
    %c0_5 = arith.constant 0 : index
    %5 = vector.load %arg4[%c0_4, %c0_5] : memref<8x32xf32, #tpu.memory_space<vmem>>, vector<8x32xf32>
    %6 = vector.shape_cast %5 : vector<8x32xf32> to vector<1x8x32xf32>
    %7 = vector.broadcast %6 : vector<1x8x32xf32> to vector<2x8x32xf32>
    %8 = arith.addf %4, %7 : vector<2x8x32xf32>
    %c0_6 = arith.constant 0 : index
    %c0_7 = arith.constant 0 : index
    %9 = vector.load %arg5[%c0_6, %c0_7] : memref<1x32xf32, #tpu.memory_space<vmem>>, vector<1x32xf32>
    %10 = vector.shape_cast %9 : vector<1x32xf32> to vector<1x1x32xf32>
    %11 = vector.broadcast %10 : vector<1x1x32xf32> to vector<2x8x32xf32>
    %12 = arith.mulf %8, %11 : vector<2x8x32xf32>
    %cst_8 = arith.constant dense<0.000000e+00> : vector<2x8xf32>
    %13 = vector.multi_reduction <add>, %12, %cst_8 [2] : vector<2x8x32xf32> to vector<2x8xf32>
    %c0_9 = arith.constant 0 : index
    %c0_10 = arith.constant 0 : index
    %14 = vector.load %arg2[%c0_9, %c0_10] : memref<2x8xf32, #tpu.memory_space<vmem>>, vector<2x8xf32>
    %15 = arith.addf %13, %14 : vector<2x8xf32>
    %cst_11 = arith.constant dense<0xFF800000> : vector<2xf32>
    %16 = vector.multi_reduction <maximumf>, %15, %cst_11 [1] : vector<2x8xf32> to vector<2xf32>
    %17 = vector.shape_cast %16 : vector<2xf32> to vector<2x1xf32>
    %18 = vector.broadcast %17 : vector<2x1xf32> to vector<2x8xf32>
    %19 = arith.subf %15, %18 : vector<2x8xf32>
    %20 = math.exp %19 : vector<2x8xf32>
    %cst_12 = arith.constant dense<0.000000e+00> : vector<2xf32>
    %21 = vector.multi_reduction <add>, %20, %cst_12 [1] : vector<2x8xf32> to vector<2xf32>
    %22 = vector.shape_cast %21 : vector<2xf32> to vector<2x1xf32>
    %23 = tpu.reciprocal %22 {approx = true} : vector<2x1xf32> -> vector<2x1xf32>
    %24 = vector.broadcast %23 : vector<2x1xf32> to vector<2x8xf32>
    %25 = arith.mulf %20, %24 : vector<2x8xf32>
    %26 = vector.shape_cast %25 : vector<2x8xf32> to vector<2x8x1xf32>
    %27 = vector.broadcast %26 : vector<2x8x1xf32> to vector<2x8x32xf32>
    %28 = arith.mulf %27, %8 : vector<2x8x32xf32>
    %cst_13 = arith.constant dense<0.000000e+00> : vector<2x32xf32>
    %29 = vector.multi_reduction <add>, %28, %cst_13 [1] : vector<2x8x32xf32> to vector<2x32xf32>
    %c0_14 = arith.constant 0 : index
    %c0_15 = arith.constant 0 : index
    %30 = vector.load %arg6[%c0_14, %c0_15] : memref<32x16xf32, #tpu.memory_space<vmem>>, vector<32x16xf32>
    %cst_16 = arith.constant dense<0.000000e+00> : vector<2x16xf32>
    %31 = tpu.matmul %29, %30, %cst_16 {dimension_numbers = #tpu.dot_dimension_numbers<[1], [0], [0], [1], [0, 0, 1, 1], [], []>} : vector<2x32xf32>, vector<32x16xf32>, vector<2x16xf32> -> vector<2x16xf32>
    %c0_17 = arith.constant 0 : index
    %c0_18 = arith.constant 0 : index
    %32 = vector.load %arg7[%c0_17, %c0_18] : memref<1x16xf32, #tpu.memory_space<vmem>>, vector<1x16xf32>
    %33 = vector.broadcast %32 : vector<1x16xf32> to vector<2x16xf32>
    %34 = arith.addf %31, %33 : vector<2x16xf32>
    %cst_19 = arith.constant 0.000000e+00 : f32
    %35 = vector.broadcast %cst_19 : f32 to vector<2x16xf32>
    %36 = arith.maximumf %34, %35 : vector<2x16xf32>
    %c0_20 = arith.constant 0 : index
    %c0_21 = arith.constant 0 : index
    %37 = vector.load %arg8[%c0_20, %c0_21] : memref<1x16xf32, #tpu.memory_space<vmem>>, vector<1x16xf32>
    %38 = vector.broadcast %37 : vector<1x16xf32> to vector<2x16xf32>
    %39 = arith.mulf %36, %38 : vector<2x16xf32>
    %cst_22 = arith.constant dense<0.000000e+00> : vector<2xf32>
    %40 = vector.multi_reduction <add>, %39, %cst_22 [1] : vector<2x16xf32> to vector<2xf32>
    %c0_23 = arith.constant 0 : index
    %c0_24 = arith.constant 0 : index
    %41 = memref.load %arg9[%c0_23, %c0_24] : memref<1x1xf32, #tpu.memory_space<smem>>
    %42 = vector.broadcast %41 : f32 to vector<2xf32>
    %43 = arith.addf %40, %42 : vector<2xf32>
    %44 = arith.negf %43 : vector<2xf32>
    %45 = math.exp %44 : vector<2xf32>
    %cst_25 = arith.constant 1.000000e+00 : f32
    %46 = vector.broadcast %cst_25 : f32 to vector<2xf32>
    %47 = arith.addf %46, %45 : vector<2xf32>
    %48 = arith.divf %46, %47 : vector<2xf32>
    %c0_26 = arith.constant 0 : index
    %c0_27 = arith.constant 0 : index
    %49 = vector.load %arg10[%c0_26, %c0_27] : memref<1x2xf32, #tpu.memory_space<vmem>>, vector<1x2xf32>
    %50 = vector.shape_cast %49 : vector<1x2xf32> to vector<2xf32>
    %51 = vector.shape_cast %48 : vector<2xf32> to vector<1x2xf32>
    tpu.vector_store %arg10[%c0_26, %c0_27], %51 {strides = array<i32>} : memref<1x2xf32, #tpu.memory_space<vmem>>, vector<1x2xf32>,
    return
  }
  func.func @transform_0(%arg0: i32) -> (i32, i32, i32) {
    %c0_i32 = arith.constant 0 : i32
    %c0_i32_0 = arith.constant 0 : i32
    %c0_i32_1 = arith.constant 0 : i32
    return %arg0, %c0_i32, %c0_i32_0 : i32, i32, i32
  }
  func.func @transform_1(%arg0: i32) -> (i32, i32) {
    %c0_i32 = arith.constant 0 : i32
    %c0_i32_0 = arith.constant 0 : i32
    return %arg0, %c0_i32 : i32, i32
  }
  func.func @transform_2(%arg0: i32) -> (i32, i32) {
    %c0_i32 = arith.constant 0 : i32
    %c0_i32_0 = arith.constant 0 : i32
    %c0_i32_1 = arith.constant 0 : i32
    return %c0_i32, %c0_i32_0 : i32, i32
  }
  func.func @transform_3(%arg0: i32) -> (i32, i32) {
    %c0_i32 = arith.constant 0 : i32
    %c0_i32_0 = arith.constant 0 : i32
    %c0_i32_1 = arith.constant 0 : i32
    return %c0_i32, %c0_i32_0 : i32, i32
  }
  func.func @transform_4(%arg0: i32) -> (i32, i32) {
    %c0_i32 = arith.constant 0 : i32
    %c0_i32_0 = arith.constant 0 : i32
    %c0_i32_1 = arith.constant 0 : i32
    return %c0_i32, %c0_i32_0 : i32, i32
  }
  func.func @transform_5(%arg0: i32) -> (i32, i32) {
    %c0_i32 = arith.constant 0 : i32
    %c0_i32_0 = arith.constant 0 : i32
    %c0_i32_1 = arith.constant 0 : i32
    return %c0_i32, %c0_i32_0 : i32, i32
  }
  func.func @transform_6(%arg0: i32) -> (i32, i32) {
    %c0_i32 = arith.constant 0 : i32
    %c0_i32_0 = arith.constant 0 : i32
    %c0_i32_1 = arith.constant 0 : i32
    return %c0_i32, %c0_i32_0 : i32, i32
  }
  func.func @transform_7(%arg0: i32) -> (i32, i32) {
    %c0_i32 = arith.constant 0 : i32
    %c0_i32_0 = arith.constant 0 : i32
    %c0_i32_1 = arith.constant 0 : i32
    return %c0_i32, %c0_i32_0 : i32, i32
  }
  func.func @transform_8(%arg0: i32) -> (i32, i32) {
    %c0_i32 = arith.constant 0 : i32
    %c0_i32_0 = arith.constant 0 : i32
    %c0_i32_1 = arith.constant 0 : i32
    return %c0_i32, %c0_i32_0 : i32, i32
  }
  func.func @transform_9(%arg0: i32) -> (i32, i32) {
    %c0_i32 = arith.constant 0 : i32
    %c0_i32_0 = arith.constant 0 : i32
    return %arg0, %c0_i32 : i32, i32
  }
}

</mosaic_0001>

<llo_original>
// kernel: tpu_custom_call.1
$region0: #{tpu_custom_call.1}
  #allocation0 [shape = 'u32[]', space=smem, size = 0x4, offset = 0x4, fixed_abs, tag = 'smem constant byte address 0x4 - core index']
  #allocation1 [shape = 'u32[72,128]{1,0:T(1,128)}', space=vmem, size = 0x9000, scoped, tag = 'internal scratch']
  #allocation2 [shape = 'f32[1,1]{1,0:T(1,128)S(6)}', space=smem, size = 0x200, scoped, tag = 'scoped memory for tpu_custom_call.1']
  %s0 = inlined_call_operand.vmem [shape: f32[2,8,5], index: 0, kind: input, shape index: {}]
  %s1 = inlined_call_operand.vmem [shape: f32[2,8], index: 1, kind: input, shape index: {}]
  %s2 = inlined_call_operand.vmem [shape: f32[5,32], index: 2, kind: input, shape index: {}]
  %s3 = inlined_call_operand.vmem [shape: f32[8,32], index: 3, kind: input, shape index: {}]
  %s4 = inlined_call_operand.vmem [shape: f32[1,32], index: 4, kind: input, shape index: {}]
  %s5 = inlined_call_operand.vmem [shape: f32[32,16], index: 5, kind: input, shape index: {}]
  %s6 = inlined_call_operand.vmem [shape: f32[1,16], index: 6, kind: input, shape index: {}]
  %s7 = inlined_call_operand.vmem [shape: f32[1,16], index: 7, kind: input, shape index: {}]
  %s8 = inlined_call_operand.<no memory space> [shape: f32[1,1], index: 8, kind: input, shape index: {}]
  %s9 = inlined_call_operand.hbm [shape: f32[1,2], index: 9, kind: output, shape index: {}]
  %s10 = sld [smem:[#allocation0]]
  $region46: #{tpu_custom_call.1} parent=0
    _
  %s12 = ssub.s32 1, %s10
  %s13 = scalar_select 0, %s12, %s10
  %14 = sst [smem:[#allocation2]] %s8
  $region1: #{tpu_custom_call.1} parent=0
    #allocation3 [shape = 'u8[512]{0}', space=vmem, size = 0x400, scoped, tag = 'output window, operand 0, single buffered']
    #allocation4 [shape = 's32[1]{0}', space=sflag, size = 0x4, scoped, tag = 'scoped memory for tpu_custom_call.1']
    %15 = vsyncpa [#allocation4], 0
    // Predicated region
    $region2: #{tpu_custom_call.1} parent=1 // pred_check
      _
    $region3: #{tpu_custom_call.1} parent=1 // pred_check_branch
      %17 = sbr.rel (0) target = $region5
    $region4: #{tpu_custom_call.1} parent=1 // pred_region
      _
    $region5: #{tpu_custom_call.1} parent=1 // pred_fallthru
      _
    // Predicated region
    $region6: #{tpu_custom_call.1} parent=1 // pred_check
      _
    $region7: #{tpu_custom_call.1} parent=1 // pred_check_branch
      %19 = sbr.rel (0) target = $region9
    $region8: #{tpu_custom_call.1} parent=1 // pred_region
      _
    $region9: #{tpu_custom_call.1} parent=1 // pred_fallthru
      _
    // Predicated region
    $region10: #{tpu_custom_call.1} parent=1 // pred_check
      _
    $region11: #{tpu_custom_call.1} parent=1 // pred_check_branch
      %21 = sbr.rel (0) target = $region13
    $region12: #{tpu_custom_call.1} parent=1 // pred_region
      _
    $region13: #{tpu_custom_call.1} parent=1 // pred_fallthru
      _
    // Predicated region
    $region14: #{tpu_custom_call.1} parent=1 // pred_check
      _
    $region15: #{tpu_custom_call.1} parent=1 // pred_check_branch
      %23 = sbr.rel (0) target = $region17
    $region16: #{tpu_custom_call.1} parent=1 // pred_region
      _
    $region17: #{tpu_custom_call.1} parent=1 // pred_fallthru
      _
    // Predicated region
    $region18: #{tpu_custom_call.1} parent=1 // pred_check
      _
    $region19: #{tpu_custom_call.1} parent=1 // pred_check_branch
      %25 = sbr.rel (0) target = $region21
    $region20: #{tpu_custom_call.1} parent=1 // pred_region
      _
    $region21: #{tpu_custom_call.1} parent=1 // pred_fallthru
      _
    // Predicated region
    $region22: #{tpu_custom_call.1} parent=1 // pred_check
      _
    $region23: #{tpu_custom_call.1} parent=1 // pred_check_branch
      %27 = sbr.rel (0) target = $region25
    $region24: #{tpu_custom_call.1} parent=1 // pred_region
      _
    $region25: #{tpu_custom_call.1} parent=1 // pred_fallthru
      _
    // Predicated region
    $region26: #{tpu_custom_call.1} parent=1 // pred_check
      _
    $region27: #{tpu_custom_call.1} parent=1 // pred_check_branch
      %29 = sbr.rel (0) target = $region29
    $region28: #{tpu_custom_call.1} parent=1 // pred_region
      _
    $region29: #{tpu_custom_call.1} parent=1 // pred_fallthru
      _
    // Predicated region
    $region30: #{tpu_custom_call.1} parent=1 // pred_check
      _
    $region31: #{tpu_custom_call.1} parent=1 // pred_check_branch
      %31 = sbr.rel (0) target = $region33
    $region32: #{tpu_custom_call.1} parent=1 // pred_region
      _
    $region33: #{tpu_custom_call.1} parent=1 // pred_fallthru
      _
    // Predicated region
    $region34: #{tpu_custom_call.1} parent=1 // pred_check
      _
    $region35: #{tpu_custom_call.1} parent=1 // pred_check_branch
      %33 = sbr.rel (0) target = $region37
    $region36: #{tpu_custom_call.1} parent=1 // pred_region
      _
    $region37: #{tpu_custom_call.1} parent=1 // pred_fallthru
      _
    %v34 = vld [vmem:[%s0] sm:$0xff]
    %v35 = vld [vmem:[%s0 + $0x8] sm:$0xff]
    %v36 = vld [vmem:[%s2] sm:$0x1f]
    %vm37 = vcmask 39936
    %v39 = vsel %vm37, %v34, 0
    %v42 = vsel %vm37, %v35, 0
    %vm44 = vcmask 1044480
    %v46 = vsel %vm44, %v36, 0
    %48 = vmatpush.msra.mxu0 0.0
    %49 = vmatpush.msra.mxu0 0.0
    %50 = vmatpush.msra.mxu0 0.0
    %51 = vmatpush.msra.mxu0 0.0
    %52 = vmatpush.msra.mxu0 0.0
    %53 = vmatpush.msra.mxu0 0.0
    %54 = vmatpush.msra.mxu0 0.0
    %55 = vmatpush.msra.mxu0 0.0
    %56 = vmatpush.msra.mxu0 0.0
    %57 = vmatpush.msra.mxu0 0.0
    %58 = vmatpush.msra.mxu0 0.0
    %59 = vmatpush.msra.mxu0 0.0
    %60 = vmatpush.msra.mxu0 0.0
    %61 = vmatpush.msra.mxu0 0.0
    %62 = vmatpush.msra.mxu0 0.0
    %63 = vmatpush.msra.mxu0 %v46
    %64 = vmatmul.f32.gmra.mxu0 %v39
    %v65 = vpop.f32.mrf.mxu0
    %v66 = vadd.f32 0.0, %v65
    %67 = vmatmul.f32.gmra.mxu0 %v42
    %v68 = vpop.f32.mrf.mxu0
    %v69 = vadd.f32 0.0, %v68
    %70 = vdwg.mxu0
    %v71 = vld [vmem:[%s3] sm:$0xff]
    %v72 = vadd.f32 %v66, %v71
    %v73 = vadd.f32 %v69, %v71
    %v74 = vld [vmem:[%s4] sm:$0x1]
    %v76 = vperm.slane %v74, 0
    %v78 = vmul.f32 %v72, %v76
    %v79 = vmul.f32 %v73, %v76
    %vm80 = vcmask 261120
    %v81 = vsel %vm80, %v78, 0.0
    %82 = vadd.xlane.f32.xlu0 %v81
    %v83 = vpop.xlane.xlu0 %82
    %v84 = vsel %vm80, %v79, 0.0
    %85 = vadd.xlane.f32.xlu0 %v84
    %v86 = vpop.xlane.xlu0 %85
    %v87 = vld [vmem:[%s1] sm:$0x3]
    %v89 = vperm.slane %v87, 0
    %v90 = vlaneseq
    %v91 = vshrl.u32 %v90, 7
    %93 = vset.pattern.permute.xlu0 %v91
    %94 = vperm.xlu0 %93, %v89
    %v95 = vpop.permute.xlu0 %94
    %v96 = vperm.slane %v87, 1
    %v97 = vlaneseq
    %v98 = vshrl.u32 %v97, 7
    %100 = vset.pattern.permute.xlu0 %v98
    %101 = vperm.xlu0 %100, %v96
    %v102 = vpop.permute.xlu0 %101
    %v105 = vadd.f32 %v83, %v95
    %v106 = vadd.f32 %v86, %v102
    %109 = vset.pattern.permute.xlu0 0
    %110 = vperm.xlu0 %109, %v105
    %v111 = vpop.permute.xlu0 %110
    %112 = vset.pattern.permute.xlu0 0
    %113 = vperm.xlu0 %112, %v106
    %v114 = vpop.permute.xlu0 %113
    %v115 = vlaneseq
    %v116 = vand.u32 %v115, 127
    %v117 = vperm.slane %v111, %v116
    %v118 = vperm.slane %v114, %v116
    %vm119 = vcmask 1041409
    %v120 = vsel %vm119, %v118, %v117
    %vm122 = vcmask 58368
    %v123 = vsel %vm122, %v120, -inf
    %124 = vmax.xlane.f32.xlu0 %v123
    %v125 = vpop.xlane.xlu0 %124
    %v127 = vperm.slane %v125, 0
    %v128 = vperm.slane %v125, 1
    %v131 = vsub.f32 %v105, %v127
    %v132 = vsub.f32 %v106, %v128
    %v133 = vmul.f32 %v131, 1.442695
    %v134 = vpow.pop %v133
    %v135 = vmul.f32 %v132, 1.442695
    %v136 = vpow.pop %v135
    %139 = vset.pattern.permute.xlu0 0
    %140 = vperm.xlu0 %139, %v134
    %v141 = vpop.permute.xlu0 %140
    %142 = vset.pattern.permute.xlu0 0
    %143 = vperm.xlu0 %142, %v136
    %v144 = vpop.permute.xlu0 %143
    %v145 = vperm.slane %v141, %v116
    %v146 = vperm.slane %v144, %v116
    %v147 = vsel %vm119, %v146, %v145
    %v149 = vsel %vm122, %v147, 0.0
    %150 = vadd.xlane.f32.xlu0 %v149
    %v151 = vpop.xlane.xlu0 %150
    %v152 = vrcp.pop %v151
    %v154 = vperm.slane %v152, 0
    %v155 = vperm.slane %v152, 1
    %v158 = vmul.f32 %v134, %v154
    %v159 = vmul.f32 %v136, %v155
    %161 = vset.pattern.permute.xlu0 0
    %162 = vperm.xlu0 %161, %v158
    %v163 = vpop.permute.xlu0 %162
    %166 = vset.pattern.permute.xlu0 0
    %167 = vperm.xlu0 %166, %v159
    %v168 = vpop.permute.xlu0 %167
    %v170 = vmul.f32 %v163, %v72
    %v171 = vmul.f32 %v168, %v73
    %v172 = vsel %vm80, %v170, 0.0
    %v173 = vrot.slane %v172, 4
    %v174 = vadd.f32 %v172, %v173
    %v175 = vrot.slane %v174, 2
    %v176 = vadd.f32 %v174, %v175
    %v177 = vrot.slane %v176, 1
    %v178 = vadd.f32 %v176, %v177
    %v179 = vsel %vm80, %v171, 0.0
    %v180 = vrot.slane %v179, 4
    %v181 = vadd.f32 %v179, %v180
    %v182 = vrot.slane %v181, 2
    %v183 = vadd.f32 %v181, %v182
    %v184 = vrot.slane %v183, 1
    %v185 = vadd.f32 %v183, %v184
    %v186 = vld [vmem:[%s5] sm:$0xff]
    %v187 = vld [vmem:[%s5 + $0x8] sm:$0xff]
    %v188 = vld [vmem:[%s5 + $0x10] sm:$0xff]
    %v189 = vld [vmem:[%s5 + $0x18] sm:$0xff]
    %v190 = vld [vmem:[%s6] sm:$0x1]
    %v192 = vperm.slane %v190, 0
    %v196 = vsel %vm119, %v185, %v178
    %v197 = vsel %vm80, %v196, 0
    %199 = vmatpush.msra.mxu0 0.0
    %200 = vmatpush.msra.mxu0 0.0
    %201 = vmatpush.msra.mxu0 0.0
    %202 = vmatpush.msra.mxu0 0.0
    %203 = vmatpush.msra.mxu0 0.0
    %204 = vmatpush.msra.mxu0 0.0
    %205 = vmatpush.msra.mxu0 0.0
    %206 = vmatpush.msra.mxu0 0.0
    %207 = vmatpush.msra.mxu0 0.0
    %208 = vmatpush.msra.mxu0 0.0
    %209 = vmatpush.msra.mxu0 0.0
    %210 = vmatpush.msra.mxu0 0.0
    %211 = vmatpush.msra.mxu0 %v189
    %212 = vmatpush.msra.mxu0 %v188
    %213 = vmatpush.msra.mxu0 %v187
    %214 = vmatpush.msra.mxu0 %v186
    %215 = vmatmul.f32.gmra.mxu0 %v197
    %v216 = vpop.f32.mrf.mxu0
    %v217 = vadd.f32 %v192, %v216
    %218 = vdwg.mxu0
    %v219 = vmax.f32 %v217, 0.0
    %v220 = vld [vmem:[%s7] sm:$0x1]
    %v222 = vperm.slane %v220, 0
    %v224 = vmul.f32 %v219, %v222
    %vm225 = vcmask 123904
    %v226 = vsel %vm225, %v224, 0.0
    %227 = vadd.xlane.f32.xlu0 %v226
    %v228 = vpop.xlane.xlu0 %227
    %s229 = sld [smem:[#allocation2]]
    %v230 = vstv %s229
    %v231 = vadd.f32 %v228, %v230
    %v232 = vxor.u32 %v231, 2147483648
    %v233 = vmul.f32 %v232, 1.442695
    %v234 = vpow.pop %v233
    %v235 = vadd.f32 %v234, 1.0
    %v236 = vrcp.pop %v235
    %v237 = vmul.f32 %v235, %v236
    %v238 = vsub.f32 1.0, %v237
    %v239 = vmul.f32 %v236, %v238
    %v240 = vadd.f32 %v236, %v239
    %vm241 = vweird.f32 %v235
    %vm242 = vweird.f32 %v236
    %vm243 = vmor %vm241, %vm242
    %v244 = vsel %vm243, %v236, %v240
    %v245 = vand.u32 2147483647, %v235
    %vm246 = vcmp.eq.f32.partialorder %v245, 8.507059e+37
    %v247 = vand.u32 %v235, 2147483648
    %v248 = vor.u32 1.1754944e-38, %v247
    %v249 = vsel %vm246, %v248, %v244
    %v250 = vmul.f32 1.0, %v249
    %v252 = vperm.slane %v250, %v116
    %vm254 = vcmask 8192
    %255 = vst.msk [vmem:[#allocation3] sm:$0x1] %vm254, %v252
    // Predicated region
    $region38: #{tpu_custom_call.1} parent=1 // pred_check
      _
    $region39: #{tpu_custom_call.1} parent=1 // pred_check_branch
      %257 = sbr.rel (0) target = $region41
    $region40: #{tpu_custom_call.1} parent=1 // pred_region
      %259 = vsyncadd [#allocation4], 0
      %s261 = sshll.u32 [#allocation3], 4
      %s262 = int_to_ptr.vmem [resolvable:$true] %s261
      %s263 = sshll.u32 %s9, 4
      %s264 = int_to_ptr.hbm [resolvable:$true] %s263
      %266 = dma.vmem_to_hbm [thread:$0]  %s262, 16, %s264, [#allocation4]
    $region41: #{tpu_custom_call.1} parent=1 // pred_fallthru
      _
    // Predicated region
    $region42: #{tpu_custom_call.1} parent=1 // pred_check
      _
    $region43: #{tpu_custom_call.1} parent=1 // pred_check_branch
      %268 = sbr.rel (0) target = $region45
    $region44: #{tpu_custom_call.1} parent=1 // pred_region
      %270 = dma.done [#allocation4], 16
    $region45: #{tpu_custom_call.1} parent=1 // pred_fallthru
      _
    %271 = vsyncpa [#allocation4], 1

</llo_original>
